<compile_context>
chip_gen: v7x
topology: tpu7x:2x2x1
jax: 0.10.0
libtpu: 0.0.40
codegen_flags: <defaults>
</compile_context>

<pallas_src>
import functools

import jax
import jax.numpy as jnp
from jax.experimental import pallas as pl
from jax.experimental.pallas import tpu as pltpu


def _gradient_loss_kernel(a_ref, b_ref, f_ref, out_ref, *, tn, h, w):
    """Per-block kernel.  a/b/f refs are (TN, H, W); out is a (1, W) partial."""

    # Edge masks: built once per grid step, reused for all 3 images x TN.
    row = jax.lax.broadcasted_iota(jnp.int32, (h, w), 0)
    col = jax.lax.broadcasted_iota(jnp.int32, (h, w), 1)
    is_top = row == 0
    is_bot = row == (h - 1)
    is_left = col == 0
    is_right = col == (w - 1)

    def lane_shifts(x):
        # x[i, j-1] / x[i, j+1] with edge replication.
        # roll = XLU slot (cheap), where = single VPU select per shift.
        left = jnp.where(is_left, x, pltpu.roll(x, 1, axis=1))
        right = jnp.where(is_right, x, pltpu.roll(x, w - 1, axis=1))
        return left, right

    def row_shifts(x):
        # x[i-1, j] / x[i+1, j] with edge replication.
        up = jnp.where(is_top, x, pltpu.roll(x, 1, axis=0))
        dn = jnp.where(is_bot, x, pltpu.roll(x, h - 1, axis=0))
        return up, dn

    def sobel_abs(x):
        # Separable Sobel with replicate padding -> (|gx|, |gy|).
        left, right = lane_shifts(x)
        dx = right - left                # horizontal central difference
        sy = left + 2.0 * x + right      # horizontal smoothing
        # x / left / right are dead from here on: small live set.
        du, dd = row_shifts(dx)
        gx = du + 2.0 * dx + dd
        su, sd = row_shifts(sy)
        gy = sd - su
        return jnp.abs(gx), jnp.abs(gy)

    acc = jnp.zeros((1, w), jnp.float32)
    for t in range(tn):  # short static unroll over the images in this block
        a_x, a_y = sobel_abs(a_ref[t].astype(jnp.float32))
        b_x, b_y = sobel_abs(b_ref[t].astype(jnp.float32))
        tgt_x = jnp.maximum(a_x, b_x)    # fold A/B immediately into targets
        tgt_y = jnp.maximum(a_y, b_y)
        f_x, f_y = sobel_abs(f_ref[t].astype(jnp.float32))
        err = jnp.abs(f_x - tgt_x) + jnp.abs(f_y - tgt_y)
        # Sublane-only reduction -> lane-dense (1, W) partial.
        acc = acc + jnp.sum(err, axis=0, keepdims=True)

    out_ref[...] = acc


def _pick_tn(n, h, w):
    """Images per grid step: amortize step overhead, stay within VMEM budget."""
    bytes_per_img = h * w * 4
    # keep 3 inputs x 2 pipeline buffers x TN images comfortably small
    cap_by_vmem = max(1, (4 * 1024 * 1024) // max(1, 6 * bytes_per_img))
    cap = min(8, cap_by_vmem, n)         # also bound the static unroll
    tn = 1
    for c in range(1, cap + 1):
        if n % c == 0:
            tn = c
    return tn


def l_gradient_loss(image_A, image_B, image_fuse):
    """JAX/Pallas equivalent of L_gradient.forward (mask==None path).

    Inputs are NCHW with C == 1.  Returns a scalar float32 loss.
    """
    assert image_A.shape == image_B.shape == image_fuse.shape
    N, C, H, W = image_A.shape
    assert C == 1, "sobel kernel is single-channel (1,1,3,3)"

    # Squeeze channel dim (metadata-only for contiguous arrays).
    a = image_A.reshape(N, H, W)
    b = image_B.reshape(N, H, W)
    f = image_fuse.reshape(N, H, W)

    TN = _pick_tn(N, H, W)
    G = N // TN

    img_spec = pl.BlockSpec((TN, H, W), lambda n: (n, 0, 0))
    out_spec = pl.BlockSpec((None, 1, W), lambda n: (n, 0, 0))

    # Explicit VMEM budget: 3 inputs x 2 buffers x block + temporaries,
    # never above 64 MiB (v7x physical per-TC capacity).
    block_bytes = TN * H * W * 4
    vmem_limit = int(min(64 * 1024 * 1024,
                         max(32 * 1024 * 1024, 12 * block_bytes + (2 << 20))))

    kernel = functools.partial(_gradient_loss_kernel, tn=TN, h=H, w=W)

    partials = pl.pallas_call(
        kernel,
        out_shape=jax.ShapeDtypeStruct((G, 1, W), jnp.float32),
        grid=(G,),
        in_specs=[img_spec, img_spec, img_spec],
        out_specs=out_spec,
        compiler_params=pltpu.CompilerParams(
            dimension_semantics=("parallel",),
            vmem_limit_bytes=vmem_limit,
        ),
    )(a, b, f)

    # Each of the two fused l1_loss terms is a mean over N*1*H*W elements.
    n_elems = jnp.float32(N * H * W)
    return jnp.sum(partials) / n_elems


def _reference_loss(image_A, image_B, image_fuse):
    """Pure-JAX reference matching the PyTorch module (mask==None path)."""

    def sobel_abs(x):
        x = x.astype(jnp.float32)[:, 0]
        xp = jnp.pad(x, ((0, 0), (1, 1), (1, 1)), mode="edge")
        N, Hp, Wp = xp.shape
        H, W = Hp - 2, Wp - 2
        p = lambda di, dj: xp[:, di:di + H, dj:dj + W]
        gx = -p(0, 0) + p(0, 2) - 2 * p(1, 0) + 2 * p(1, 2) - p(2, 0) + p(2, 2)
        gy = -p(0, 0) - 2 * p(0, 1) - p(0, 2) + p(2, 0) + 2 * p(2, 1) + p(2, 2)
        return jnp.abs(gx), jnp.abs(gy)

    ax, ay = sobel_abs(image_A)
    bx, by = sobel_abs(image_B)
    fx, fy = sobel_abs(image_fuse)
    return (jnp.mean(jnp.abs(fx - jnp.maximum(ax, bx)))
            + jnp.mean(jnp.abs(fy - jnp.maximum(ay, by))))


if __name__ == "__main__":
    key = jax.random.PRNGKey(0)
    kA, kB, kF = jax.random.split(key, 3)
    N, C, H, W = 2, 1, 16, 16
    image_A = jax.random.uniform(kA, (N, C, H, W), dtype=jnp.float32)
    image_B = jax.random.uniform(kB, (N, C, H, W), dtype=jnp.float32)
    image_fuse = jax.random.uniform(kF, (N, C, H, W), dtype=jnp.float32)

    loss = jax.block_until_ready(l_gradient_loss(image_A, image_B, image_fuse))
    ref = jax.block_until_ready(_reference_loss(image_A, image_B, image_fuse))

    assert jnp.allclose(loss, ref, rtol=1e-5, atol=1e-5), (loss, ref)
    print("KERNEL_OK")
</pallas_src>

<mosaic_0001>
module attributes {stable_mosaic.version = 11 : i64} {
  func.func @_gradient_loss_kernel(%arg0: i32, %arg1: memref<2x16x16xf32, #tpu.memory_space<vmem>>, %arg2: memref<2x16x16xf32, #tpu.memory_space<vmem>>, %arg3: memref<2x16x16xf32, #tpu.memory_space<vmem>>, %arg4: memref<1x1x16xf32, #tpu.memory_space<vmem>>) attributes {dimension_semantics = [#tpu.dimension_semantics<parallel>], iteration_bounds = array<i64: 1>, scalar_prefetch = 0 : i64, scratch_operands = 0 : i64, tpu.core_type = #tpu.core_type<tc>, window_params = [{transform_indices = @transform_0, window_bounds = array<i64: 2, 16, 16>}, {transform_indices = @transform_1, window_bounds = array<i64: 2, 16, 16>}, {transform_indices = @transform_2, window_bounds = array<i64: 2, 16, 16>}, {transform_indices = @transform_3, window_bounds = array<i64: 1, 1, 16>}]} {
    %0 = tpu.iota {dimensions = array<i32: 0>} : vector<16x16xi32>
    %1 = tpu.iota {dimensions = array<i32: 1>} : vector<16x16xi32>
    %c0_i32 = arith.constant 0 : i32
    %2 = vector.broadcast %c0_i32 : i32 to vector<16x16xi32>
    %3 = arith.cmpi eq, %0, %2 : vector<16x16xi32>
    %c15_i32 = arith.constant 15 : i32
    %4 = vector.broadcast %c15_i32 : i32 to vector<16x16xi32>
    %5 = arith.cmpi eq, %0, %4 : vector<16x16xi32>
    %c0_i32_0 = arith.constant 0 : i32
    %6 = vector.broadcast %c0_i32_0 : i32 to vector<16x16xi32>
    %7 = arith.cmpi eq, %1, %6 : vector<16x16xi32>
    %c15_i32_1 = arith.constant 15 : i32
    %8 = vector.broadcast %c15_i32_1 : i32 to vector<16x16xi32>
    %9 = arith.cmpi eq, %1, %8 : vector<16x16xi32>
    %cst = arith.constant 0.000000e+00 : f32
    %10 = vector.broadcast %cst : f32 to vector<1x16xf32>
    %c0 = arith.constant 0 : index
    %c0_2 = arith.constant 0 : index
    %c0_3 = arith.constant 0 : index
    %11 = vector.load %arg1[%c0, %c0_2, %c0_3] : memref<2x16x16xf32, #tpu.memory_space<vmem>>, vector<1x16x16xf32>
    %12 = vector.shape_cast %11 : vector<1x16x16xf32> to vector<16x16xf32>
    %c1_i32 = arith.constant 1 : i32
    %13 = tpu.dynamic_rotate %12 by %c1_i32 dim 1 : vector<16x16xf32>, i32 -> vector<16x16xf32>
    %14 = arith.select %7, %12, %13 : vector<16x16xi1>, vector<16x16xf32>
    %c15_i32_4 = arith.constant 15 : i32
    %15 = tpu.dynamic_rotate %12 by %c15_i32_4 dim 1 : vector<16x16xf32>, i32 -> vector<16x16xf32>
    %16 = arith.select %9, %12, %15 : vector<16x16xi1>, vector<16x16xf32>
    %17 = arith.subf %16, %14 : vector<16x16xf32>
    %cst_5 = arith.constant 2.000000e+00 : f32
    %18 = vector.broadcast %cst_5 : f32 to vector<16x16xf32>
    %19 = arith.mulf %18, %12 : vector<16x16xf32>
    %20 = arith.addf %14, %19 : vector<16x16xf32>
    %21 = arith.addf %20, %16 : vector<16x16xf32>
    %c1_i32_6 = arith.constant 1 : i32
    %22 = tpu.dynamic_rotate %17 by %c1_i32_6 dim 0 : vector<16x16xf32>, i32 -> vector<16x16xf32>
    %23 = arith.select %3, %17, %22 : vector<16x16xi1>, vector<16x16xf32>
    %c15_i32_7 = arith.constant 15 : i32
    %24 = tpu.dynamic_rotate %17 by %c15_i32_7 dim 0 : vector<16x16xf32>, i32 -> vector<16x16xf32>
    %25 = arith.select %5, %17, %24 : vector<16x16xi1>, vector<16x16xf32>
    %cst_8 = arith.constant 2.000000e+00 : f32
    %26 = vector.broadcast %cst_8 : f32 to vector<16x16xf32>
    %27 = arith.mulf %26, %17 : vector<16x16xf32>
    %28 = arith.addf %23, %27 : vector<16x16xf32>
    %29 = arith.addf %28, %25 : vector<16x16xf32>
    %c1_i32_9 = arith.constant 1 : i32
    %30 = tpu.dynamic_rotate %21 by %c1_i32_9 dim 0 : vector<16x16xf32>, i32 -> vector<16x16xf32>
    %31 = arith.select %3, %21, %30 : vector<16x16xi1>, vector<16x16xf32>
    %c15_i32_10 = arith.constant 15 : i32
    %32 = tpu.dynamic_rotate %21 by %c15_i32_10 dim 0 : vector<16x16xf32>, i32 -> vector<16x16xf32>
    %33 = arith.select %5, %21, %32 : vector<16x16xi1>, vector<16x16xf32>
    %34 = arith.subf %33, %31 : vector<16x16xf32>
    %35 = math.absf %29 : vector<16x16xf32>
    %36 = math.absf %34 : vector<16x16xf32>
    %c0_11 = arith.constant 0 : index
    %c0_12 = arith.constant 0 : index
    %c0_13 = arith.constant 0 : index
    %37 = vector.load %arg2[%c0_11, %c0_12, %c0_13] : memref<2x16x16xf32, #tpu.memory_space<vmem>>, vector<1x16x16xf32>
    %38 = vector.shape_cast %37 : vector<1x16x16xf32> to vector<16x16xf32>
    %c1_i32_14 = arith.constant 1 : i32
    %39 = tpu.dynamic_rotate %38 by %c1_i32_14 dim 1 : vector<16x16xf32>, i32 -> vector<16x16xf32>
    %40 = arith.select %7, %38, %39 : vector<16x16xi1>, vector<16x16xf32>
    %c15_i32_15 = arith.constant 15 : i32
    %41 = tpu.dynamic_rotate %38 by %c15_i32_15 dim 1 : vector<16x16xf32>, i32 -> vector<16x16xf32>
    %42 = arith.select %9, %38, %41 : vector<16x16xi1>, vector<16x16xf32>
    %43 = arith.subf %42, %40 : vector<16x16xf32>
    %cst_16 = arith.constant 2.000000e+00 : f32
    %44 = vector.broadcast %cst_16 : f32 to vector<16x16xf32>
    %45 = arith.mulf %44, %38 : vector<16x16xf32>
    %46 = arith.addf %40, %45 : vector<16x16xf32>
    %47 = arith.addf %46, %42 : vector<16x16xf32>
    %c1_i32_17 = arith.constant 1 : i32
    %48 = tpu.dynamic_rotate %43 by %c1_i32_17 dim 0 : vector<16x16xf32>, i32 -> vector<16x16xf32>
    %49 = arith.select %3, %43, %48 : vector<16x16xi1>, vector<16x16xf32>
    %c15_i32_18 = arith.constant 15 : i32
    %50 = tpu.dynamic_rotate %43 by %c15_i32_18 dim 0 : vector<16x16xf32>, i32 -> vector<16x16xf32>
    %51 = arith.select %5, %43, %50 : vector<16x16xi1>, vector<16x16xf32>
    %cst_19 = arith.constant 2.000000e+00 : f32
    %52 = vector.broadcast %cst_19 : f32 to vector<16x16xf32>
    %53 = arith.mulf %52, %43 : vector<16x16xf32>
    %54 = arith.addf %49, %53 : vector<16x16xf32>
    %55 = arith.addf %54, %51 : vector<16x16xf32>
    %c1_i32_20 = arith.constant 1 : i32
    %56 = tpu.dynamic_rotate %47 by %c1_i32_20 dim 0 : vector<16x16xf32>, i32 -> vector<16x16xf32>
    %57 = arith.select %3, %47, %56 : vector<16x16xi1>, vector<16x16xf32>
    %c15_i32_21 = arith.constant 15 : i32
    %58 = tpu.dynamic_rotate %47 by %c15_i32_21 dim 0 : vector<16x16xf32>, i32 -> vector<16x16xf32>
    %59 = arith.select %5, %47, %58 : vector<16x16xi1>, vector<16x16xf32>
    %60 = arith.subf %59, %57 : vector<16x16xf32>
    %61 = math.absf %55 : vector<16x16xf32>
    %62 = math.absf %60 : vector<16x16xf32>
    %63 = arith.maximumf %35, %61 : vector<16x16xf32>
    %64 = arith.maximumf %36, %62 : vector<16x16xf32>
    %c0_22 = arith.constant 0 : index
    %c0_23 = arith.constant 0 : index
    %c0_24 = arith.constant 0 : index
    %65 = vector.load %arg3[%c0_22, %c0_23, %c0_24] : memref<2x16x16xf32, #tpu.memory_space<vmem>>, vector<1x16x16xf32>
    %66 = vector.shape_cast %65 : vector<1x16x16xf32> to vector<16x16xf32>
    %c1_i32_25 = arith.constant 1 : i32
    %67 = tpu.dynamic_rotate %66 by %c1_i32_25 dim 1 : vector<16x16xf32>, i32 -> vector<16x16xf32>
    %68 = arith.select %7, %66, %67 : vector<16x16xi1>, vector<16x16xf32>
    %c15_i32_26 = arith.constant 15 : i32
    %69 = tpu.dynamic_rotate %66 by %c15_i32_26 dim 1 : vector<16x16xf32>, i32 -> vector<16x16xf32>
    %70 = arith.select %9, %66, %69 : vector<16x16xi1>, vector<16x16xf32>
    %71 = arith.subf %70, %68 : vector<16x16xf32>
    %cst_27 = arith.constant 2.000000e+00 : f32
    %72 = vector.broadcast %cst_27 : f32 to vector<16x16xf32>
    %73 = arith.mulf %72, %66 : vector<16x16xf32>
    %74 = arith.addf %68, %73 : vector<16x16xf32>
    %75 = arith.addf %74, %70 : vector<16x16xf32>
    %c1_i32_28 = arith.constant 1 : i32
    %76 = tpu.dynamic_rotate %71 by %c1_i32_28 dim 0 : vector<16x16xf32>, i32 -> vector<16x16xf32>
    %77 = arith.select %3, %71, %76 : vector<16x16xi1>, vector<16x16xf32>
    %c15_i32_29 = arith.constant 15 : i32
    %78 = tpu.dynamic_rotate %71 by %c15_i32_29 dim 0 : vector<16x16xf32>, i32 -> vector<16x16xf32>
    %79 = arith.select %5, %71, %78 : vector<16x16xi1>, vector<16x16xf32>
    %cst_30 = arith.constant 2.000000e+00 : f32
    %80 = vector.broadcast %cst_30 : f32 to vector<16x16xf32>
    %81 = arith.mulf %80, %71 : vector<16x16xf32>
    %82 = arith.addf %77, %81 : vector<16x16xf32>
    %83 = arith.addf %82, %79 : vector<16x16xf32>
    %c1_i32_31 = arith.constant 1 : i32
    %84 = tpu.dynamic_rotate %75 by %c1_i32_31 dim 0 : vector<16x16xf32>, i32 -> vector<16x16xf32>
    %85 = arith.select %3, %75, %84 : vector<16x16xi1>, vector<16x16xf32>
    %c15_i32_32 = arith.constant 15 : i32
    %86 = tpu.dynamic_rotate %75 by %c15_i32_32 dim 0 : vector<16x16xf32>, i32 -> vector<16x16xf32>
    %87 = arith.select %5, %75, %86 : vector<16x16xi1>, vector<16x16xf32>
    %88 = arith.subf %87, %85 : vector<16x16xf32>
    %89 = math.absf %83 : vector<16x16xf32>
    %90 = math.absf %88 : vector<16x16xf32>
    %91 = arith.subf %89, %63 : vector<16x16xf32>
    %92 = math.absf %91 : vector<16x16xf32>
    %93 = arith.subf %90, %64 : vector<16x16xf32>
    %94 = math.absf %93 : vector<16x16xf32>
    %95 = arith.addf %92, %94 : vector<16x16xf32>
    %cst_33 = arith.constant dense<0.000000e+00> : vector<16xf32>
    %96 = vector.multi_reduction <add>, %95, %cst_33 [0] : vector<16x16xf32> to vector<16xf32>
    %97 = vector.shape_cast %96 : vector<16xf32> to vector<1x16xf32>
    %98 = arith.addf %10, %97 : vector<1x16xf32>
    %c1 = arith.constant 1 : index
    %c0_34 = arith.constant 0 : index
    %c0_35 = arith.constant 0 : index
    %99 = vector.load %arg1[%c1, %c0_34, %c0_35] : memref<2x16x16xf32, #tpu.memory_space<vmem>>, vector<1x16x16xf32>
    %100 = vector.shape_cast %99 : vector<1x16x16xf32> to vector<16x16xf32>
    %c1_i32_36 = arith.constant 1 : i32
    %101 = tpu.dynamic_rotate %100 by %c1_i32_36 dim 1 : vector<16x16xf32>, i32 -> vector<16x16xf32>
    %102 = arith.select %7, %100, %101 : vector<16x16xi1>, vector<16x16xf32>
    %c15_i32_37 = arith.constant 15 : i32
    %103 = tpu.dynamic_rotate %100 by %c15_i32_37 dim 1 : vector<16x16xf32>, i32 -> vector<16x16xf32>
    %104 = arith.select %9, %100, %103 : vector<16x16xi1>, vector<16x16xf32>
    %105 = arith.subf %104, %102 : vector<16x16xf32>
    %cst_38 = arith.constant 2.000000e+00 : f32
    %106 = vector.broadcast %cst_38 : f32 to vector<16x16xf32>
    %107 = arith.mulf %106, %100 : vector<16x16xf32>
    %108 = arith.addf %102, %107 : vector<16x16xf32>
    %109 = arith.addf %108, %104 : vector<16x16xf32>
    %c1_i32_39 = arith.constant 1 : i32
    %110 = tpu.dynamic_rotate %105 by %c1_i32_39 dim 0 : vector<16x16xf32>, i32 -> vector<16x16xf32>
    %111 = arith.select %3, %105, %110 : vector<16x16xi1>, vector<16x16xf32>
    %c15_i32_40 = arith.constant 15 : i32
    %112 = tpu.dynamic_rotate %105 by %c15_i32_40 dim 0 : vector<16x16xf32>, i32 -> vector<16x16xf32>
    %113 = arith.select %5, %105, %112 : vector<16x16xi1>, vector<16x16xf32>
    %cst_41 = arith.constant 2.000000e+00 : f32
    %114 = vector.broadcast %cst_41 : f32 to vector<16x16xf32>
    %115 = arith.mulf %114, %105 : vector<16x16xf32>
    %116 = arith.addf %111, %115 : vector<16x16xf32>
    %117 = arith.addf %116, %113 : vector<16x16xf32>
    %c1_i32_42 = arith.constant 1 : i32
    %118 = tpu.dynamic_rotate %109 by %c1_i32_42 dim 0 : vector<16x16xf32>, i32 -> vector<16x16xf32>
    %119 = arith.select %3, %109, %118 : vector<16x16xi1>, vector<16x16xf32>
    %c15_i32_43 = arith.constant 15 : i32
    %120 = tpu.dynamic_rotate %109 by %c15_i32_43 dim 0 : vector<16x16xf32>, i32 -> vector<16x16xf32>
    %121 = arith.select %5, %109, %120 : vector<16x16xi1>, vector<16x16xf32>
    %122 = arith.subf %121, %119 : vector<16x16xf32>
    %123 = math.absf %117 : vector<16x16xf32>
    %124 = math.absf %122 : vector<16x16xf32>
    %c1_44 = arith.constant 1 : index
    %c0_45 = arith.constant 0 : index
    %c0_46 = arith.constant 0 : index
    %125 = vector.load %arg2[%c1_44, %c0_45, %c0_46] : memref<2x16x16xf32, #tpu.memory_space<vmem>>, vector<1x16x16xf32>
    %126 = vector.shape_cast %125 : vector<1x16x16xf32> to vector<16x16xf32>
    %c1_i32_47 = arith.constant 1 : i32
    %127 = tpu.dynamic_rotate %126 by %c1_i32_47 dim 1 : vector<16x16xf32>, i32 -> vector<16x16xf32>
    %128 = arith.select %7, %126, %127 : vector<16x16xi1>, vector<16x16xf32>
    %c15_i32_48 = arith.constant 15 : i32
    %129 = tpu.dynamic_rotate %126 by %c15_i32_48 dim 1 : vector<16x16xf32>, i32 -> vector<16x16xf32>
    %130 = arith.select %9, %126, %129 : vector<16x16xi1>, vector<16x16xf32>
    %131 = arith.subf %130, %128 : vector<16x16xf32>
    %cst_49 = arith.constant 2.000000e+00 : f32
    %132 = vector.broadcast %cst_49 : f32 to vector<16x16xf32>
    %133 = arith.mulf %132, %126 : vector<16x16xf32>
    %134 = arith.addf %128, %133 : vector<16x16xf32>
    %135 = arith.addf %134, %130 : vector<16x16xf32>
    %c1_i32_50 = arith.constant 1 : i32
    %136 = tpu.dynamic_rotate %131 by %c1_i32_50 dim 0 : vector<16x16xf32>, i32 -> vector<16x16xf32>
    %137 = arith.select %3, %131, %136 : vector<16x16xi1>, vector<16x16xf32>
    %c15_i32_51 = arith.constant 15 : i32
    %138 = tpu.dynamic_rotate %131 by %c15_i32_51 dim 0 : vector<16x16xf32>, i32 -> vector<16x16xf32>
    %139 = arith.select %5, %131, %138 : vector<16x16xi1>, vector<16x16xf32>
    %cst_52 = arith.constant 2.000000e+00 : f32
    %140 = vector.broadcast %cst_52 : f32 to vector<16x16xf32>
    %141 = arith.mulf %140, %131 : vector<16x16xf32>
    %142 = arith.addf %137, %141 : vector<16x16xf32>
    %143 = arith.addf %142, %139 : vector<16x16xf32>
    %c1_i32_53 = arith.constant 1 : i32
    %144 = tpu.dynamic_rotate %135 by %c1_i32_53 dim 0 : vector<16x16xf32>, i32 -> vector<16x16xf32>
    %145 = arith.select %3, %135, %144 : vector<16x16xi1>, vector<16x16xf32>
    %c15_i32_54 = arith.constant 15 : i32
    %146 = tpu.dynamic_rotate %135 by %c15_i32_54 dim 0 : vector<16x16xf32>, i32 -> vector<16x16xf32>
    %147 = arith.select %5, %135, %146 : vector<16x16xi1>, vector<16x16xf32>
    %148 = arith.subf %147, %145 : vector<16x16xf32>
    %149 = math.absf %143 : vector<16x16xf32>
    %150 = math.absf %148 : vector<16x16xf32>
    %151 = arith.maximumf %123, %149 : vector<16x16xf32>
    %152 = arith.maximumf %124, %150 : vector<16x16xf32>
    %c1_55 = arith.constant 1 : index
    %c0_56 = arith.constant 0 : index
    %c0_57 = arith.constant 0 : index
    %153 = vector.load %arg3[%c1_55, %c0_56, %c0_57] : memref<2x16x16xf32, #tpu.memory_space<vmem>>, vector<1x16x16xf32>
    %154 = vector.shape_cast %153 : vector<1x16x16xf32> to vector<16x16xf32>
    %c1_i32_58 = arith.constant 1 : i32
    %155 = tpu.dynamic_rotate %154 by %c1_i32_58 dim 1 : vector<16x16xf32>, i32 -> vector<16x16xf32>
    %156 = arith.select %7, %154, %155 : vector<16x16xi1>, vector<16x16xf32>
    %c15_i32_59 = arith.constant 15 : i32
    %157 = tpu.dynamic_rotate %154 by %c15_i32_59 dim 1 : vector<16x16xf32>, i32 -> vector<16x16xf32>
    %158 = arith.select %9, %154, %157 : vector<16x16xi1>, vector<16x16xf32>
    %159 = arith.subf %158, %156 : vector<16x16xf32>
    %cst_60 = arith.constant 2.000000e+00 : f32
    %160 = vector.broadcast %cst_60 : f32 to vector<16x16xf32>
    %161 = arith.mulf %160, %154 : vector<16x16xf32>
    %162 = arith.addf %156, %161 : vector<16x16xf32>
    %163 = arith.addf %162, %158 : vector<16x16xf32>
    %c1_i32_61 = arith.constant 1 : i32
    %164 = tpu.dynamic_rotate %159 by %c1_i32_61 dim 0 : vector<16x16xf32>, i32 -> vector<16x16xf32>
    %165 = arith.select %3, %159, %164 : vector<16x16xi1>, vector<16x16xf32>
    %c15_i32_62 = arith.constant 15 : i32
    %166 = tpu.dynamic_rotate %159 by %c15_i32_62 dim 0 : vector<16x16xf32>, i32 -> vector<16x16xf32>
    %167 = arith.select %5, %159, %166 : vector<16x16xi1>, vector<16x16xf32>
    %cst_63 = arith.constant 2.000000e+00 : f32
    %168 = vector.broadcast %cst_63 : f32 to vector<16x16xf32>
    %169 = arith.mulf %168, %159 : vector<16x16xf32>
    %170 = arith.addf %165, %169 : vector<16x16xf32>
    %171 = arith.addf %170, %167 : vector<16x16xf32>
    %c1_i32_64 = arith.constant 1 : i32
    %172 = tpu.dynamic_rotate %163 by %c1_i32_64 dim 0 : vector<16x16xf32>, i32 -> vector<16x16xf32>
    %173 = arith.select %3, %163, %172 : vector<16x16xi1>, vector<16x16xf32>
    %c15_i32_65 = arith.constant 15 : i32
    %174 = tpu.dynamic_rotate %163 by %c15_i32_65 dim 0 : vector<16x16xf32>, i32 -> vector<16x16xf32>
    %175 = arith.select %5, %163, %174 : vector<16x16xi1>, vector<16x16xf32>
    %176 = arith.subf %175, %173 : vector<16x16xf32>
    %177 = math.absf %171 : vector<16x16xf32>
    %178 = math.absf %176 : vector<16x16xf32>
    %179 = arith.subf %177, %151 : vector<16x16xf32>
    %180 = math.absf %179 : vector<16x16xf32>
    %181 = arith.subf %178, %152 : vector<16x16xf32>
    %182 = math.absf %181 : vector<16x16xf32>
    %183 = arith.addf %180, %182 : vector<16x16xf32>
    %cst_66 = arith.constant dense<0.000000e+00> : vector<16xf32>
    %184 = vector.multi_reduction <add>, %183, %cst_66 [0] : vector<16x16xf32> to vector<16xf32>
    %185 = vector.shape_cast %184 : vector<16xf32> to vector<1x16xf32>
    %186 = arith.addf %98, %185 : vector<1x16xf32>
    %c0_67 = arith.constant 0 : index
    %c0_68 = arith.constant 0 : index
    %c0_69 = arith.constant 0 : index
    %187 = vector.load %arg4[%c0_67, %c0_68, %c0_69] : memref<1x1x16xf32, #tpu.memory_space<vmem>>, vector<1x1x16xf32>
    %188 = vector.shape_cast %187 : vector<1x1x16xf32> to vector<1x16xf32>
    %189 = vector.shape_cast %186 : vector<1x16xf32> to vector<1x1x16xf32>
    tpu.vector_store %arg4[%c0_67, %c0_68, %c0_69], %189 {strides = array<i32>} : memref<1x1x16xf32, #tpu.memory_space<vmem>>, vector<1x1x16xf32>,
    return
  }
  func.func @transform_0(%arg0: i32) -> (i32, i32, i32) {
    %c0_i32 = arith.constant 0 : i32
    %c0_i32_0 = arith.constant 0 : i32
    %c0_i32_1 = arith.constant 0 : i32
    return %arg0, %c0_i32, %c0_i32_0 : i32, i32, i32
  }
  func.func @transform_1(%arg0: i32) -> (i32, i32, i32) {
    %c0_i32 = arith.constant 0 : i32
    %c0_i32_0 = arith.constant 0 : i32
    %c0_i32_1 = arith.constant 0 : i32
    return %arg0, %c0_i32, %c0_i32_0 : i32, i32, i32
  }
  func.func @transform_2(%arg0: i32) -> (i32, i32, i32) {
    %c0_i32 = arith.constant 0 : i32
    %c0_i32_0 = arith.constant 0 : i32
    %c0_i32_1 = arith.constant 0 : i32
    return %arg0, %c0_i32, %c0_i32_0 : i32, i32, i32
  }
  func.func @transform_3(%arg0: i32) -> (i32, i32, i32) {
    %c0_i32 = arith.constant 0 : i32
    %c0_i32_0 = arith.constant 0 : i32
    %c0_i32_1 = arith.constant 0 : i32
    return %arg0, %c0_i32, %c0_i32_0 : i32, i32, i32
  }
}

</mosaic_0001>

<llo_original>
// kernel: tpu_custom_call.1
$region0: #{tpu_custom_call.1}
  #allocation0 [shape = 'u32[]', space=smem, size = 0x4, offset = 0x4, fixed_abs, tag = 'smem constant byte address 0x4 - core index']
  #allocation1 [shape = 'u32[144,128]{1,0:T(1,128)}', space=vmem, size = 0x12000, scoped, tag = 'internal scratch']
  %s0 = inlined_call_operand.hbm [shape: f32[2,16,16], index: 0, kind: input, shape index: {}]
  %s1 = inlined_call_operand.hbm [shape: f32[2,16,16], index: 1, kind: input, shape index: {}]
  %s2 = inlined_call_operand.hbm [shape: f32[2,16,16], index: 2, kind: input, shape index: {}]
  %s3 = inlined_call_operand.hbm [shape: f32[1,1,16], index: 3, kind: output, shape index: {}]
  %s4 = sld [smem:[#allocation0]]
  $region34: #{tpu_custom_call.1} parent=0
    _
  %s6 = ssub.s32 1, %s4
  %s7 = scalar_select 0, %s6, %s4
  $region1: #{tpu_custom_call.1} parent=0
    #allocation2 [shape = 'u8[16384]{0}', space=vmem, size = 0x4000, scoped, tag = 'input window, operand 0, single buffered']
    #allocation3 [shape = 's32[1]{0}', space=sflag, size = 0x4, scoped, tag = 'scoped memory for tpu_custom_call.1']
    #allocation4 [shape = 's32[1]{0}', space=sflag, size = 0x4, scoped, tag = 'scoped memory for tpu_custom_call.1']
    #allocation5 [shape = 'u8[16384]{0}', space=vmem, size = 0x4000, scoped, tag = 'input window, operand 1, single buffered']
    #allocation6 [shape = 's32[1]{0}', space=sflag, size = 0x4, scoped, tag = 'scoped memory for tpu_custom_call.1']
    #allocation7 [shape = 'u8[16384]{0}', space=vmem, size = 0x4000, scoped, tag = 'input window, operand 2, single buffered']
    #allocation8 [shape = 'u8[512]{0}', space=vmem, size = 0x400, scoped, tag = 'output window, operand 0, single buffered']
    %8 = vsyncpa [#allocation3], 0
    %9 = vsyncpa [#allocation6], 0
    %10 = vsyncpa [#allocation4], 0
    // Predicated region
    $region2: #{tpu_custom_call.1} parent=1 // pred_check
      _
    $region3: #{tpu_custom_call.1} parent=1 // pred_check_branch
      %12 = sbr.rel (0) target = $region5
    $region4: #{tpu_custom_call.1} parent=1 // pred_region
      %s14 = ssub.s32 512, 512
      %15 = vsyncadd [#allocation3], %s14
      %s16 = sshll.u32 [#allocation2], 4
      %s17 = int_to_ptr.vmem [resolvable:$true] %s16
      %22 = dma.hbm_to_vmem [thread:$0]  %s0, 512, %s17, [#allocation3], 128, 128, 8
    $region5: #{tpu_custom_call.1} parent=1 // pred_fallthru
      _
    // Predicated region
    $region6: #{tpu_custom_call.1} parent=1 // pred_check
      _
    $region7: #{tpu_custom_call.1} parent=1 // pred_check_branch
      %24 = sbr.rel (0) target = $region9
    $region8: #{tpu_custom_call.1} parent=1 // pred_region
      %s26 = ssub.s32 512, 512
      %27 = vsyncadd [#allocation6], %s26
      %s28 = sshll.u32 [#allocation5], 4
      %s29 = int_to_ptr.vmem [resolvable:$true] %s28
      %34 = dma.hbm_to_vmem [thread:$0]  %s1, 512, %s29, [#allocation6], 128, 128, 8
    $region9: #{tpu_custom_call.1} parent=1 // pred_fallthru
      _
    // Predicated region
    $region10: #{tpu_custom_call.1} parent=1 // pred_check
      _
    $region11: #{tpu_custom_call.1} parent=1 // pred_check_branch
      %36 = sbr.rel (0) target = $region13
    $region12: #{tpu_custom_call.1} parent=1 // pred_region
      %s38 = ssub.s32 512, 512
      %39 = vsyncadd [#allocation6], %s38
      %s40 = sshll.u32 [#allocation7], 4
      %s41 = int_to_ptr.vmem [resolvable:$true] %s40
      %46 = dma.hbm_to_vmem [thread:$0]  %s2, 512, %s41, [#allocation6], 128, 128, 8
    $region13: #{tpu_custom_call.1} parent=1 // pred_fallthru
      _
    // Predicated region
    $region14: #{tpu_custom_call.1} parent=1 // pred_check
      _
    $region15: #{tpu_custom_call.1} parent=1 // pred_check_branch
      %48 = sbr.rel (0) target = $region17
    $region16: #{tpu_custom_call.1} parent=1 // pred_region
      %49 = dma.done [#allocation3], 512
    $region17: #{tpu_custom_call.1} parent=1 // pred_fallthru
      _
    // Predicated region
    $region18: #{tpu_custom_call.1} parent=1 // pred_check
      _
    $region19: #{tpu_custom_call.1} parent=1 // pred_check_branch
      %51 = sbr.rel (0) target = $region21
    $region20: #{tpu_custom_call.1} parent=1 // pred_region
      %52 = dma.done [#allocation6], 512
    $region21: #{tpu_custom_call.1} parent=1 // pred_fallthru
      _
    // Predicated region
    $region22: #{tpu_custom_call.1} parent=1 // pred_check
      _
    $region23: #{tpu_custom_call.1} parent=1 // pred_check_branch
      %54 = sbr.rel (0) target = $region25
    $region24: #{tpu_custom_call.1} parent=1 // pred_region
      %55 = dma.done [#allocation6], 512
    $region25: #{tpu_custom_call.1} parent=1 // pred_fallthru
      _
    %v56 = vlaneseq
    %v57 = vshrl.u32 %v56, 7
    %v58 = vadd.s32 %v57, 8
    %v59 = vlaneseq
    %v60 = vand.u32 %v59, 127
    %vm61 = vcmp.eq.s32.totalorder %v57, 0
    %vm62 = vcmp.eq.s32.totalorder %v58, 0
    %vm63 = vcmp.eq.s32.totalorder %v57, 15
    %vm64 = vcmp.eq.s32.totalorder %v58, 15
    %vm65 = vcmp.eq.s32.totalorder %v60, 0
    %vm66 = vcmp.eq.s32.totalorder %v60, 15
    %v67 = vld [vmem:[#allocation2] sm:$0xff]
    %v68 = vld [vmem:[#allocation2 + $0x8] sm:$0xff]
    %vm69 = vcmask 1047680
    %70 = vrot.lane.b32.xlu0 %v67, 16
    %v71 = vpop.permute.xlu0 %70
    %v72 = vsel %vm69, %v71, %v67
    %73 = vrot.lane.b32.xlu0 %v68, 16
    %v74 = vpop.permute.xlu0 %73
    %v75 = vsel %vm69, %v74, %v68
    %76 = vrot.lane.b32.xlu0 %v72, 16
    %v77 = vpop.permute.xlu0 %76
    %78 = vrot.lane.b32.xlu0 %v75, 16
    %v79 = vpop.permute.xlu0 %78
    %v80 = vsel %vm69, %v77, %v67
    %v81 = vsel %vm69, %v79, %v68
    %84 = vrot.lane.b32.xlu0 %v80, 113
    %v85 = vpop.permute.xlu0 %84
    %86 = vrot.lane.b32.xlu0 %v81, 113
    %v87 = vpop.permute.xlu0 %86
    %v90 = vsel %vm65, %v67, %v85
    %v91 = vsel %vm65, %v68, %v87
    %92 = vrot.lane.b32.xlu0 %v80, 127
    %v93 = vpop.permute.xlu0 %92
    %94 = vrot.lane.b32.xlu0 %v81, 127
    %v95 = vpop.permute.xlu0 %94
    %v98 = vsel %vm66, %v67, %v93
    %v99 = vsel %vm66, %v68, %v95
    %v100 = vsub.f32 %v98, %v90
    %v101 = vsub.f32 %v99, %v91
    %v102 = vmul.f32 %v67, 2.0
    %v103 = vmul.f32 %v68, 2.0
    %v104 = vadd.f32 %v90, %v102
    %v105 = vadd.f32 %v91, %v103
    %v106 = vadd.f32 %v104, %v98
    %v107 = vadd.f32 %v105, %v99
    %v108 = vrot.slane %v100, 7
    %v109 = vrot.slane %v101, 7
    %vm110 = vcmp.lt.s32.totalorder %v57, 1
    %v111 = vsel %vm110, %v108, %v109
    %v112 = vsel %vm110, %v109, %v108
    %v113 = vsel %vm61, %v100, %v112
    %v114 = vsel %vm62, %v101, %v111
    %v115 = vrot.slane %v100, 1
    %v116 = vrot.slane %v101, 1
    %vm117 = vcmp.lt.s32.totalorder %v57, 7
    %v118 = vsel %vm117, %v115, %v116
    %v119 = vsel %vm117, %v116, %v115
    %v120 = vsel %vm63, %v100, %v118
    %v121 = vsel %vm64, %v101, %v119
    %v122 = vmul.f32 %v100, 2.0
    %v123 = vmul.f32 %v101, 2.0
    %v124 = vadd.f32 %v113, %v122
    %v125 = vadd.f32 %v114, %v123
    %v126 = vadd.f32 %v124, %v120
    %v127 = vadd.f32 %v125, %v121
    %v128 = vrot.slane %v106, 7
    %v129 = vrot.slane %v107, 7
    %v130 = vsel %vm110, %v128, %v129
    %v131 = vsel %vm110, %v129, %v128
    %v132 = vsel %vm61, %v106, %v131
    %v133 = vsel %vm62, %v107, %v130
    %v134 = vrot.slane %v106, 1
    %v135 = vrot.slane %v107, 1
    %v136 = vsel %vm117, %v134, %v135
    %v137 = vsel %vm117, %v135, %v134
    %v138 = vsel %vm63, %v106, %v136
    %v139 = vsel %vm64, %v107, %v137
    %v140 = vsub.f32 %v138, %v132
    %v141 = vsub.f32 %v139, %v133
    %v142 = vand.u32 2147483647, %v126
    %v143 = vand.u32 2147483647, %v127
    %v144 = vand.u32 2147483647, %v140
    %v145 = vand.u32 2147483647, %v141
    %v146 = vld [vmem:[#allocation5] sm:$0xff]
    %v147 = vld [vmem:[#allocation5 + $0x8] sm:$0xff]
    %148 = vrot.lane.b32.xlu0 %v146, 16
    %v149 = vpop.permute.xlu0 %148
    %v150 = vsel %vm69, %v149, %v146
    %151 = vrot.lane.b32.xlu0 %v147, 16
    %v152 = vpop.permute.xlu0 %151
    %v153 = vsel %vm69, %v152, %v147
    %154 = vrot.lane.b32.xlu0 %v150, 16
    %v155 = vpop.permute.xlu0 %154
    %156 = vrot.lane.b32.xlu0 %v153, 16
    %v157 = vpop.permute.xlu0 %156
    %v158 = vsel %vm69, %v155, %v146
    %v159 = vsel %vm69, %v157, %v147
    %162 = vrot.lane.b32.xlu0 %v158, 113
    %v163 = vpop.permute.xlu0 %162
    %164 = vrot.lane.b32.xlu0 %v159, 113
    %v165 = vpop.permute.xlu0 %164
    %v168 = vsel %vm65, %v146, %v163
    %v169 = vsel %vm65, %v147, %v165
    %170 = vrot.lane.b32.xlu0 %v158, 127
    %v171 = vpop.permute.xlu0 %170
    %172 = vrot.lane.b32.xlu0 %v159, 127
    %v173 = vpop.permute.xlu0 %172
    %v176 = vsel %vm66, %v146, %v171
    %v177 = vsel %vm66, %v147, %v173
    %v178 = vsub.f32 %v176, %v168
    %v179 = vsub.f32 %v177, %v169
    %v180 = vmul.f32 %v146, 2.0
    %v181 = vmul.f32 %v147, 2.0
    %v182 = vadd.f32 %v168, %v180
    %v183 = vadd.f32 %v169, %v181
    %v184 = vadd.f32 %v182, %v176
    %v185 = vadd.f32 %v183, %v177
    %v186 = vrot.slane %v178, 7
    %v187 = vrot.slane %v179, 7
    %v188 = vsel %vm110, %v186, %v187
    %v189 = vsel %vm110, %v187, %v186
    %v190 = vsel %vm61, %v178, %v189
    %v191 = vsel %vm62, %v179, %v188
    %v192 = vrot.slane %v178, 1
    %v193 = vrot.slane %v179, 1
    %v194 = vsel %vm117, %v192, %v193
    %v195 = vsel %vm117, %v193, %v192
    %v196 = vsel %vm63, %v178, %v194
    %v197 = vsel %vm64, %v179, %v195
    %v198 = vmul.f32 %v178, 2.0
    %v199 = vmul.f32 %v179, 2.0
    %v200 = vadd.f32 %v190, %v198
    %v201 = vadd.f32 %v191, %v199
    %v202 = vadd.f32 %v200, %v196
    %v203 = vadd.f32 %v201, %v197
    %v204 = vrot.slane %v184, 7
    %v205 = vrot.slane %v185, 7
    %v206 = vsel %vm110, %v204, %v205
    %v207 = vsel %vm110, %v205, %v204
    %v208 = vsel %vm61, %v184, %v207
    %v209 = vsel %vm62, %v185, %v206
    %v210 = vrot.slane %v184, 1
    %v211 = vrot.slane %v185, 1
    %v212 = vsel %vm117, %v210, %v211
    %v213 = vsel %vm117, %v211, %v210
    %v214 = vsel %vm63, %v184, %v212
    %v215 = vsel %vm64, %v185, %v213
    %v216 = vsub.f32 %v214, %v208
    %v217 = vsub.f32 %v215, %v209
    %v218 = vand.u32 2147483647, %v202
    %v219 = vand.u32 2147483647, %v203
    %v220 = vand.u32 2147483647, %v216
    %v221 = vand.u32 2147483647, %v217
    %v222 = vmax.f32 %v142, %v218
    %v223 = vmax.f32 %v143, %v219
    %v224 = vmax.f32 %v144, %v220
    %v225 = vmax.f32 %v145, %v221
    %v226 = vld [vmem:[#allocation7] sm:$0xff]
    %v227 = vld [vmem:[#allocation7 + $0x8] sm:$0xff]
    %228 = vrot.lane.b32.xlu0 %v226, 16
    %v229 = vpop.permute.xlu0 %228
    %v230 = vsel %vm69, %v229, %v226
    %231 = vrot.lane.b32.xlu0 %v227, 16
    %v232 = vpop.permute.xlu0 %231
    %v233 = vsel %vm69, %v232, %v227
    %234 = vrot.lane.b32.xlu0 %v230, 16
    %v235 = vpop.permute.xlu0 %234
    %236 = vrot.lane.b32.xlu0 %v233, 16
    %v237 = vpop.permute.xlu0 %236
    %v238 = vsel %vm69, %v235, %v226
    %v239 = vsel %vm69, %v237, %v227
    %242 = vrot.lane.b32.xlu0 %v238, 113
    %v243 = vpop.permute.xlu0 %242
    %244 = vrot.lane.b32.xlu0 %v239, 113
    %v245 = vpop.permute.xlu0 %244
    %v248 = vsel %vm65, %v226, %v243
    %v249 = vsel %vm65, %v227, %v245
    %250 = vrot.lane.b32.xlu0 %v238, 127
    %v251 = vpop.permute.xlu0 %250
    %252 = vrot.lane.b32.xlu0 %v239, 127
    %v253 = vpop.permute.xlu0 %252
    %v256 = vsel %vm66, %v226, %v251
    %v257 = vsel %vm66, %v227, %v253
    %v258 = vsub.f32 %v256, %v248
    %v259 = vsub.f32 %v257, %v249
    %v260 = vmul.f32 %v226, 2.0
    %v261 = vmul.f32 %v227, 2.0
    %v262 = vadd.f32 %v248, %v260
    %v263 = vadd.f32 %v249, %v261
    %v264 = vadd.f32 %v262, %v256
    %v265 = vadd.f32 %v263, %v257
    %v266 = vrot.slane %v258, 7
    %v267 = vrot.slane %v259, 7
    %v268 = vsel %vm110, %v266, %v267
    %v269 = vsel %vm110, %v267, %v266
    %v270 = vsel %vm61, %v258, %v269
    %v271 = vsel %vm62, %v259, %v268
    %v272 = vrot.slane %v258, 1
    %v273 = vrot.slane %v259, 1
    %v274 = vsel %vm117, %v272, %v273
    %v275 = vsel %vm117, %v273, %v272
    %v276 = vsel %vm63, %v258, %v274
    %v277 = vsel %vm64, %v259, %v275
    %v278 = vmul.f32 %v258, 2.0
    %v279 = vmul.f32 %v259, 2.0
    %v280 = vadd.f32 %v270, %v278
    %v281 = vadd.f32 %v271, %v279
    %v282 = vadd.f32 %v280, %v276
    %v283 = vadd.f32 %v281, %v277
    %v284 = vrot.slane %v264, 7
    %v285 = vrot.slane %v265, 7
    %v286 = vsel %vm110, %v284, %v285
    %v287 = vsel %vm110, %v285, %v284
    %v288 = vsel %vm61, %v264, %v287
    %v289 = vsel %vm62, %v265, %v286
    %v290 = vrot.slane %v264, 1
    %v291 = vrot.slane %v265, 1
    %v292 = vsel %vm117, %v290, %v291
    %v293 = vsel %vm117, %v291, %v290
    %v294 = vsel %vm63, %v264, %v292
    %v295 = vsel %vm64, %v265, %v293
    %v296 = vsub.f32 %v294, %v288
    %v297 = vsub.f32 %v295, %v289
    %v298 = vand.u32 2147483647, %v282
    %v299 = vand.u32 2147483647, %v283
    %v300 = vand.u32 2147483647, %v296
    %v301 = vand.u32 2147483647, %v297
    %v302 = vsub.f32 %v298, %v222
    %v303 = vsub.f32 %v299, %v223
    %v304 = vand.u32 2147483647, %v302
    %v305 = vand.u32 2147483647, %v303
    %v306 = vsub.f32 %v300, %v224
    %v307 = vsub.f32 %v301, %v225
    %v308 = vand.u32 2147483647, %v306
    %v309 = vand.u32 2147483647, %v307
    %v310 = vadd.f32 %v304, %v308
    %v311 = vadd.f32 %v305, %v309
    %vm312 = vcmask 130048
    %v313 = vsel %vm312, %v310, 0.0
    %v314 = vsel %vm312, %v311, 0.0
    %v315 = vadd.f32 %v313, %v314
    %v316 = vrot.slane %v315, 4
    %v317 = vadd.f32 %v315, %v316
    %v318 = vrot.slane %v317, 2
    %v319 = vadd.f32 %v317, %v318
    %v320 = vrot.slane %v319, 1
    %v321 = vadd.f32 %v319, %v320
    %v322 = vadd.f32 %v321, 0.0
    %s323 = scalar_lea.vmem [#allocation2], 16
    %v324 = vld [vmem:[%s323] sm:$0xff]
    %v325 = vld [vmem:[%s323 + $0x8] sm:$0xff]
    %326 = vrot.lane.b32.xlu0 %v324, 16
    %v327 = vpop.permute.xlu0 %326
    %v328 = vsel %vm69, %v327, %v324
    %329 = vrot.lane.b32.xlu0 %v325, 16
    %v330 = vpop.permute.xlu0 %329
    %v331 = vsel %vm69, %v330, %v325
    %332 = vrot.lane.b32.xlu0 %v328, 16
    %v333 = vpop.permute.xlu0 %332
    %334 = vrot.lane.b32.xlu0 %v331, 16
    %v335 = vpop.permute.xlu0 %334
    %v336 = vsel %vm69, %v333, %v324
    %v337 = vsel %vm69, %v335, %v325
    %340 = vrot.lane.b32.xlu0 %v336, 113
    %v341 = vpop.permute.xlu0 %340
    %342 = vrot.lane.b32.xlu0 %v337, 113
    %v343 = vpop.permute.xlu0 %342
    %v346 = vsel %vm65, %v324, %v341
    %v347 = vsel %vm65, %v325, %v343
    %348 = vrot.lane.b32.xlu0 %v336, 127
    %v349 = vpop.permute.xlu0 %348
    %350 = vrot.lane.b32.xlu0 %v337, 127
    %v351 = vpop.permute.xlu0 %350
    %v354 = vsel %vm66, %v324, %v349
    %v355 = vsel %vm66, %v325, %v351
    %v356 = vsub.f32 %v354, %v346
    %v357 = vsub.f32 %v355, %v347
    %v358 = vmul.f32 %v324, 2.0
    %v359 = vmul.f32 %v325, 2.0
    %v360 = vadd.f32 %v346, %v358
    %v361 = vadd.f32 %v347, %v359
    %v362 = vadd.f32 %v360, %v354
    %v363 = vadd.f32 %v361, %v355
    %v364 = vrot.slane %v356, 7
    %v365 = vrot.slane %v357, 7
    %v366 = vsel %vm110, %v364, %v365
    %v367 = vsel %vm110, %v365, %v364
    %v368 = vsel %vm61, %v356, %v367
    %v369 = vsel %vm62, %v357, %v366
    %v370 = vrot.slane %v356, 1
    %v371 = vrot.slane %v357, 1
    %v372 = vsel %vm117, %v370, %v371
    %v373 = vsel %vm117, %v371, %v370
    %v374 = vsel %vm63, %v356, %v372
    %v375 = vsel %vm64, %v357, %v373
    %v376 = vmul.f32 %v356, 2.0
    %v377 = vmul.f32 %v357, 2.0
    %v378 = vadd.f32 %v368, %v376
    %v379 = vadd.f32 %v369, %v377
    %v380 = vadd.f32 %v378, %v374
    %v381 = vadd.f32 %v379, %v375
    %v382 = vrot.slane %v362, 7
    %v383 = vrot.slane %v363, 7
    %v384 = vsel %vm110, %v382, %v383
    %v385 = vsel %vm110, %v383, %v382
    %v386 = vsel %vm61, %v362, %v385
    %v387 = vsel %vm62, %v363, %v384
    %v388 = vrot.slane %v362, 1
    %v389 = vrot.slane %v363, 1
    %v390 = vsel %vm117, %v388, %v389
    %v391 = vsel %vm117, %v389, %v388
    %v392 = vsel %vm63, %v362, %v390
    %v393 = vsel %vm64, %v363, %v391
    %v394 = vsub.f32 %v392, %v386
    %v395 = vsub.f32 %v393, %v387
    %v396 = vand.u32 2147483647, %v380
    %v397 = vand.u32 2147483647, %v381
    %v398 = vand.u32 2147483647, %v394
    %v399 = vand.u32 2147483647, %v395
    %s400 = scalar_lea.vmem [#allocation5], 16
    %v401 = vld [vmem:[%s400] sm:$0xff]
    %v402 = vld [vmem:[%s400 + $0x8] sm:$0xff]
    %403 = vrot.lane.b32.xlu0 %v401, 16
    %v404 = vpop.permute.xlu0 %403
    %v405 = vsel %vm69, %v404, %v401
    %406 = vrot.lane.b32.xlu0 %v402, 16
    %v407 = vpop.permute.xlu0 %406
    %v408 = vsel %vm69, %v407, %v402
    %409 = vrot.lane.b32.xlu0 %v405, 16
    %v410 = vpop.permute.xlu0 %409
    %411 = vrot.lane.b32.xlu0 %v408, 16
    %v412 = vpop.permute.xlu0 %411
    %v413 = vsel %vm69, %v410, %v401
    %v414 = vsel %vm69, %v412, %v402
    %417 = vrot.lane.b32.xlu0 %v413, 113
    %v418 = vpop.permute.xlu0 %417
    %419 = vrot.lane.b32.xlu0 %v414, 113
    %v420 = vpop.permute.xlu0 %419
    %v423 = vsel %vm65, %v401, %v418
    %v424 = vsel %vm65, %v402, %v420
    %425 = vrot.lane.b32.xlu0 %v413, 127
    %v426 = vpop.permute.xlu0 %425
    %427 = vrot.lane.b32.xlu0 %v414, 127
    %v428 = vpop.permute.xlu0 %427
    %v431 = vsel %vm66, %v401, %v426
    %v432 = vsel %vm66, %v402, %v428
    %v433 = vsub.f32 %v431, %v423
    %v434 = vsub.f32 %v432, %v424
    %v435 = vmul.f32 %v401, 2.0
    %v436 = vmul.f32 %v402, 2.0
    %v437 = vadd.f32 %v423, %v435
    %v438 = vadd.f32 %v424, %v436
    %v439 = vadd.f32 %v437, %v431
    %v440 = vadd.f32 %v438, %v432
    %v441 = vrot.slane %v433, 7
    %v442 = vrot.slane %v434, 7
    %v443 = vsel %vm110, %v441, %v442
    %v444 = vsel %vm110, %v442, %v441
    %v445 = vsel %vm61, %v433, %v444
    %v446 = vsel %vm62, %v434, %v443
    %v447 = vrot.slane %v433, 1
    %v448 = vrot.slane %v434, 1
    %v449 = vsel %vm117, %v447, %v448
    %v450 = vsel %vm117, %v448, %v447
    %v451 = vsel %vm63, %v433, %v449
    %v452 = vsel %vm64, %v434, %v450
    %v453 = vmul.f32 %v433, 2.0
    %v454 = vmul.f32 %v434, 2.0
    %v455 = vadd.f32 %v445, %v453
    %v456 = vadd.f32 %v446, %v454
    %v457 = vadd.f32 %v455, %v451
    %v458 = vadd.f32 %v456, %v452
    %v459 = vrot.slane %v439, 7
    %v460 = vrot.slane %v440, 7
    %v461 = vsel %vm110, %v459, %v460
    %v462 = vsel %vm110, %v460, %v459
    %v463 = vsel %vm61, %v439, %v462
    %v464 = vsel %vm62, %v440, %v461
    %v465 = vrot.slane %v439, 1
    %v466 = vrot.slane %v440, 1
    %v467 = vsel %vm117, %v465, %v466
    %v468 = vsel %vm117, %v466, %v465
    %v469 = vsel %vm63, %v439, %v467
    %v470 = vsel %vm64, %v440, %v468
    %v471 = vsub.f32 %v469, %v463
    %v472 = vsub.f32 %v470, %v464
    %v473 = vand.u32 2147483647, %v457
    %v474 = vand.u32 2147483647, %v458
    %v475 = vand.u32 2147483647, %v471
    %v476 = vand.u32 2147483647, %v472
    %v477 = vmax.f32 %v396, %v473
    %v478 = vmax.f32 %v397, %v474
    %v479 = vmax.f32 %v398, %v475
    %v480 = vmax.f32 %v399, %v476
    %s481 = scalar_lea.vmem [#allocation7], 16
    %v482 = vld [vmem:[%s481] sm:$0xff]
    %v483 = vld [vmem:[%s481 + $0x8] sm:$0xff]
    %484 = vrot.lane.b32.xlu0 %v482, 16
    %v485 = vpop.permute.xlu0 %484
    %v486 = vsel %vm69, %v485, %v482
    %487 = vrot.lane.b32.xlu0 %v483, 16
    %v488 = vpop.permute.xlu0 %487
    %v489 = vsel %vm69, %v488, %v483
    %490 = vrot.lane.b32.xlu0 %v486, 16
    %v491 = vpop.permute.xlu0 %490
    %492 = vrot.lane.b32.xlu0 %v489, 16
    %v493 = vpop.permute.xlu0 %492
    %v494 = vsel %vm69, %v491, %v482
    %v495 = vsel %vm69, %v493, %v483
    %498 = vrot.lane.b32.xlu0 %v494, 113
    %v499 = vpop.permute.xlu0 %498
    %500 = vrot.lane.b32.xlu0 %v495, 113
    %v501 = vpop.permute.xlu0 %500
    %v504 = vsel %vm65, %v482, %v499
    %v505 = vsel %vm65, %v483, %v501
    %506 = vrot.lane.b32.xlu0 %v494, 127
    %v507 = vpop.permute.xlu0 %506
    %508 = vrot.lane.b32.xlu0 %v495, 127
    %v509 = vpop.permute.xlu0 %508
    %v512 = vsel %vm66, %v482, %v507
    %v513 = vsel %vm66, %v483, %v509
    %v514 = vsub.f32 %v512, %v504
    %v515 = vsub.f32 %v513, %v505
    %v516 = vmul.f32 %v482, 2.0
    %v517 = vmul.f32 %v483, 2.0
    %v518 = vadd.f32 %v504, %v516
    %v519 = vadd.f32 %v505, %v517
    %v520 = vadd.f32 %v518, %v512
    %v521 = vadd.f32 %v519, %v513
    %v522 = vrot.slane %v514, 7
    %v523 = vrot.slane %v515, 7
    %v524 = vsel %vm110, %v522, %v523
    %v525 = vsel %vm110, %v523, %v522
    %v526 = vsel %vm61, %v514, %v525
    %v527 = vsel %vm62, %v515, %v524
    %v528 = vrot.slane %v514, 1
    %v529 = vrot.slane %v515, 1
    %v530 = vsel %vm117, %v528, %v529
    %v531 = vsel %vm117, %v529, %v528
    %v532 = vsel %vm63, %v514, %v530
    %v533 = vsel %vm64, %v515, %v531
    %v534 = vmul.f32 %v514, 2.0
    %v535 = vmul.f32 %v515, 2.0
    %v536 = vadd.f32 %v526, %v534
    %v537 = vadd.f32 %v527, %v535
    %v538 = vadd.f32 %v536, %v532
    %v539 = vadd.f32 %v537, %v533
    %v540 = vrot.slane %v520, 7
    %v541 = vrot.slane %v521, 7
    %v542 = vsel %vm110, %v540, %v541
    %v543 = vsel %vm110, %v541, %v540
    %v544 = vsel %vm61, %v520, %v543
    %v545 = vsel %vm62, %v521, %v542
    %v546 = vrot.slane %v520, 1
    %v547 = vrot.slane %v521, 1
    %v548 = vsel %vm117, %v546, %v547
    %v549 = vsel %vm117, %v547, %v546
    %v550 = vsel %vm63, %v520, %v548
    %v551 = vsel %vm64, %v521, %v549
    %v552 = vsub.f32 %v550, %v544
    %v553 = vsub.f32 %v551, %v545
    %v554 = vand.u32 2147483647, %v538
    %v555 = vand.u32 2147483647, %v539
    %v556 = vand.u32 2147483647, %v552
    %v557 = vand.u32 2147483647, %v553
    %v558 = vsub.f32 %v554, %v477
    %v559 = vsub.f32 %v555, %v478
    %v560 = vand.u32 2147483647, %v558
    %v561 = vand.u32 2147483647, %v559
    %v562 = vsub.f32 %v556, %v479
    %v563 = vsub.f32 %v557, %v480
    %v564 = vand.u32 2147483647, %v562
    %v565 = vand.u32 2147483647, %v563
    %v566 = vadd.f32 %v560, %v564
    %v567 = vadd.f32 %v561, %v565
    %v568 = vsel %vm312, %v566, 0.0
    %v569 = vsel %vm312, %v567, 0.0
    %v570 = vadd.f32 %v568, %v569
    %v571 = vrot.slane %v570, 4
    %v572 = vadd.f32 %v570, %v571
    %v573 = vrot.slane %v572, 2
    %v574 = vadd.f32 %v572, %v573
    %v575 = vrot.slane %v574, 1
    %v576 = vadd.f32 %v574, %v575
    %v577 = vadd.f32 %v322, %v576
    %vm578 = vcmask 122880
    %579 = vst.msk [vmem:[#allocation8] sm:$0x1] %vm578, %v577
    // Predicated region
    $region26: #{tpu_custom_call.1} parent=1 // pred_check
      _
    $region27: #{tpu_custom_call.1} parent=1 // pred_check_branch
      %581 = sbr.rel (0) target = $region29
    $region28: #{tpu_custom_call.1} parent=1 // pred_region
      %s583 = ssub.s32 16, 16
      %584 = vsyncadd [#allocation4], %s583
      %s586 = sshll.u32 [#allocation8], 4
      %s587 = int_to_ptr.vmem [resolvable:$true] %s586
      %589 = dma.vmem_to_hbm [thread:$0]  %s587, 16, %s3, [#allocation4]
    $region29: #{tpu_custom_call.1} parent=1 // pred_fallthru
      _
    // Predicated region
    $region30: #{tpu_custom_call.1} parent=1 // pred_check
      _
    $region31: #{tpu_custom_call.1} parent=1 // pred_check_branch
      %591 = sbr.rel (0) target = $region33
    $region32: #{tpu_custom_call.1} parent=1 // pred_region
      %592 = dma.done [#allocation4], 16
    $region33: #{tpu_custom_call.1} parent=1 // pred_fallthru
      _
    %593 = vsyncpa [#allocation3], 1
    %594 = vsyncpa [#allocation6], 1
    %595 = vsyncpa [#allocation4], 1

</llo_original>
